<compile_context>
chip_gen: v7x
topology: tpu7x:2x2x1
jax: 0.10.0
libtpu: 0.0.40
codegen_flags: <defaults>
</compile_context>

<pallas_src>
import functools

import jax
import jax.numpy as jnp
from jax.experimental import pallas as pl
from jax.experimental.pallas import tpu as pltpu


def _hbm_copy_kernel(info_ref, out_ref, sem, *, row_chunks):
    """Pure HBM->HBM DMA copy.

    info_ref / out_ref: raw HBM refs of shape (n_rows, row_len) (pl.ANY space).
    sem:                DMA semaphores, one per chunk.
    row_chunks:         static tuple of (row_start, n_rows) contiguous chunks.
    """
    copies = []
    # Issue all chunk copies first (concurrent DMA streams), then wait.
    for c, (r0, nr) in enumerate(row_chunks):
        cp = pltpu.make_async_copy(
            info_ref.at[pl.ds(r0, nr)],
            out_ref.at[pl.ds(r0, nr)],
            sem.at[c],
        )
        cp.start()
        copies.append(cp)
    for cp in copies:
        cp.wait()


def _packed_sublane_multiple(dtype):
    """Rows per packed vreg sublane group: 8 (32-bit), 16 (16-bit), 32 (8-bit)."""
    itemsize = jnp.dtype(dtype).itemsize
    return max(8, 32 // max(itemsize, 1))


def _row_chunks(n_rows, row_bytes, sub, max_chunks=4, min_chunk_bytes=1 << 20):
    """Split rows into up to `max_chunks` contiguous, sublane-aligned chunks."""
    total = n_rows * row_bytes
    if n_rows <= sub or total <= 2 * min_chunk_bytes:
        return ((0, n_rows),)
    n_chunks = int(min(max_chunks, max(1, total // min_chunk_bytes)))
    if n_chunks <= 1:
        return ((0, n_rows),)
    base = (n_rows // n_chunks // sub) * sub
    if base == 0:
        return ((0, n_rows),)
    chunks = []
    start = 0
    for _ in range(n_chunks - 1):
        chunks.append((start, base))
        start += base
    chunks.append((start, n_rows - start))
    return tuple(chunks)


def concatenate_layer(info, leng_mask=None):
    """Pallas implementation of ConcatenateLayer.forward.

    info:      (..., L, D)
    leng_mask: ignored (kept for signature parity with the torch module).
    returns:   (..., L*D) with the same dtype as info.
    """
    *lead, L, D = info.shape
    n_rows = 1
    for s in lead:
        n_rows *= s
    row_len = L * D
    out_shape = tuple(lead) + (row_len,)

    # Empty tensors: the reshape alone is the answer; avoid a degenerate kernel.
    if n_rows == 0 or row_len == 0:
        return info.reshape(out_shape)

    # Contiguous row-major collapse done in the wrapper.
    info_flat = info.reshape(n_rows, row_len)

    itemsize = jnp.dtype(info.dtype).itemsize
    row_bytes = row_len * itemsize
    chunks = _row_chunks(n_rows, row_bytes, _packed_sublane_multiple(info.dtype))

    cost = pl.CostEstimate(
        flops=0,
        transcendentals=0,
        bytes_accessed=2 * n_rows * row_bytes,
    )

    kernel = functools.partial(_hbm_copy_kernel, row_chunks=chunks)

    out_flat = pl.pallas_call(
        kernel,
        out_shape=jax.ShapeDtypeStruct((n_rows, row_len), info.dtype),
        in_specs=[pl.BlockSpec(memory_space=pl.ANY)],
        out_specs=pl.BlockSpec(memory_space=pl.ANY),
        scratch_shapes=[pltpu.SemaphoreType.DMA((len(chunks),))],
        cost_estimate=cost,
    )(info_flat)

    return out_flat.reshape(out_shape)


if __name__ == "__main__":
    key = jax.random.PRNGKey(0)
    k_info, k_mask, k_info2 = jax.random.split(key, 3)

    # Case 1: standard small shape (f32, lane-multiple row length).
    B, S, L, D = 2, 8, 4, 32
    info = jax.random.normal(k_info, (B, S, L, D), dtype=jnp.float32)
    # leng_mask is unused by the forward pass, but construct it for parity.
    leng_mask = jax.random.bernoulli(k_mask, 0.5, (B, S, L)).astype(jnp.bool_)

    out = concatenate_layer(info, leng_mask)
    out = jax.block_until_ready(out)

    ref = info.reshape(B, S, L * D)
    assert out.shape == (B, S, L * D), out.shape
    assert out.dtype == info.dtype
    assert jnp.array_equal(out, ref), "mismatch vs reference reshape (case 1)"

    # Case 2: bf16 with a row length that is NOT a multiple of 128 — the
    # HBM->HBM DMA path is insensitive to lane width.
    B2, S2, L2, D2 = 2, 4, 3, 48
    info2 = jax.random.normal(k_info2, (B2, S2, L2, D2), dtype=jnp.bfloat16)
    out2 = jax.block_until_ready(concatenate_layer(info2))
    ref2 = info2.reshape(B2, S2, L2 * D2)
    assert out2.shape == (B2, S2, L2 * D2), out2.shape
    assert out2.dtype == info2.dtype
    assert jnp.array_equal(out2, ref2), "mismatch vs reference reshape (case 2)"

    print("KERNEL_OK")
</pallas_src>

<mosaic_0001>
module attributes {stable_mosaic.version = 11 : i64} {
  func.func @_hbm_copy_kernel(%arg0: memref<16x128xf32, #tpu.memory_space<any>>, %arg1: memref<16x128xf32, #tpu.memory_space<any>>, %arg2: memref<1x!tpu.dma_semaphore, #tpu.memory_space<semaphore_mem>>) attributes {dimension_semantics = [], scalar_prefetch = 0 : i64, scratch_operands = 1 : i64, tpu.core_type = #tpu.core_type<tc>} {
    %c0_i32 = arith.constant 0 : i32
    %c0_i32_0 = arith.constant 0 : i32
    %c0_i32_1 = arith.constant 0 : i32
    %0 = tpu.memref_slice %arg0[%c0_i32_0, %c0_i32_1] : memref<16x128xf32, #tpu.memory_space<any>> -> memref<16x128xf32, #tpu.memory_space<any>>
    %c0_i32_2 = arith.constant 0 : i32
    %c0_i32_3 = arith.constant 0 : i32
    %1 = tpu.memref_slice %arg1[%c0_i32_2, %c0_i32_3] : memref<16x128xf32, #tpu.memory_space<any>> -> memref<16x128xf32, #tpu.memory_space<any>>
    %2 = tpu.memref_slice %arg2[%c0_i32] : memref<1x!tpu.dma_semaphore, #tpu.memory_space<semaphore_mem>> -> memref<1x!tpu.dma_semaphore, #tpu.memory_space<semaphore_mem>>
    %3 = tpu.memref_squeeze %2 : memref<1x!tpu.dma_semaphore, #tpu.memory_space<semaphore_mem>> -> memref<!tpu.dma_semaphore, #tpu.memory_space<semaphore_mem>>
    tpu.enqueue_dma source(%0 : memref<16x128xf32, #tpu.memory_space<any>>) target(%1 : memref<16x128xf32, #tpu.memory_space<any>>) target_semaphore(%3 : memref<!tpu.dma_semaphore, #tpu.memory_space<semaphore_mem>>)
    %c0_i32_4 = arith.constant 0 : i32
    %c0_i32_5 = arith.constant 0 : i32
    %c0_i32_6 = arith.constant 0 : i32
    %4 = tpu.memref_slice %arg0[%c0_i32_5, %c0_i32_6] : memref<16x128xf32, #tpu.memory_space<any>> -> memref<16x128xf32, #tpu.memory_space<any>>
    %c0_i32_7 = arith.constant 0 : i32
    %c0_i32_8 = arith.constant 0 : i32
    %5 = tpu.memref_slice %arg1[%c0_i32_7, %c0_i32_8] : memref<16x128xf32, #tpu.memory_space<any>> -> memref<16x128xf32, #tpu.memory_space<any>>
    %6 = tpu.memref_slice %arg2[%c0_i32_4] : memref<1x!tpu.dma_semaphore, #tpu.memory_space<semaphore_mem>> -> memref<1x!tpu.dma_semaphore, #tpu.memory_space<semaphore_mem>>
    %7 = tpu.memref_squeeze %6 : memref<1x!tpu.dma_semaphore, #tpu.memory_space<semaphore_mem>> -> memref<!tpu.dma_semaphore, #tpu.memory_space<semaphore_mem>>
    tpu.wait_dma2 semaphore(%7 : memref<!tpu.dma_semaphore, #tpu.memory_space<semaphore_mem>>) src(%4 : memref<16x128xf32, #tpu.memory_space<any>>) dst(%5 : memref<16x128xf32, #tpu.memory_space<any>>)
    return
  }
}

</mosaic_0001>

<llo_original>
// kernel: tpu_custom_call.1
$region0: #{tpu_custom_call.1}
  #allocation0 [shape = 'u32[]', space=smem, size = 0x4, offset = 0x4, fixed_abs, tag = 'smem constant byte address 0x4 - core index']
  #allocation1 [shape = 'u32[144,128]{1,0:T(1,128)}', space=vmem, size = 0x12000, scoped, tag = 'internal scratch']
  #allocation2 [shape = 's32[1]{0}', space=sflag, size = 0x4, scoped, tag = 'scratch operand']
  #allocation3 [shape = 's32[]', space=sflag, size = 0x4, offset = 0, fixed_abs, tag = 'sflag constant byte address 0x0 - dummy sync flag']
  #allocation4 [shape = 'u32[0]{0}', space=smem, size = 0, offset = 0, fixed_abs, tag = 'smem constant byte address 0x0 - null']
  %s0 = inlined_call_operand.hbm [shape: f32[16,128], index: 0, kind: input, shape index: {}]
  %s1 = inlined_call_operand.hbm [shape: f32[16,128], index: 1, kind: output, shape index: {}]
  %s2 = sld [smem:[#allocation0]]
  $region2: #{tpu_custom_call.1} parent=0
    _
  %s4 = ssub.s32 1, %s2
  %s5 = scalar_select 0, %s4, %s2
  %s7 = sshll.u32 1, 14
  %s8 = sxor.u32 4294967295, %s7
  %s11 = sshll.u32 3, 24
  %s12 = sxor.u32 4294967295, %s11
  %s13 = sand.u32 0, %s12
  %s15 = sor.u32 %s13, 0
  %18 = dma.general %s0, 256, %s1, [#allocation2], [#allocation3], [#allocation4], %s15, 0
  %s19 = smul.u32 16, 1
  %s20 = sshll.u32 %s19, 4
  %21 = dma.done [#allocation2], %s20
  %22 = vsyncmov [#allocation2]
  %s23 = vpop.sfrf %22
  %p24 = scmp.eq.s32.totalorder %s23, 0
  %p25 = pneg %p24
  %27 = shalt.err (%p25)

</llo_original>
